<compile_context>
chip_gen: v5e
topology: v5e:2x2
jax: 0.10.0
libtpu: 0.0.40
codegen_flags: <defaults>
</compile_context>

<pallas_src>
import jax
import jax.numpy as jnp
from jax import lax
from jax.experimental import pallas as pl
from jax.experimental.pallas import tpu as pltpu


def _make_kernel(compute_dtype, needs_kv_mask, kv_len):
    """Build the flash-style AttenQKlinear kernel body.

    Refs:
      x_ref   : (bt, tq, D)  query-side input tile (constant across the kv axis)
      ctx_ref : (bt, tk, D)  context tile for the current kv step (acts as K and V)
      w_ref   : (D, D)       fused weight (Wq^T @ Wk) * D**-0.5  (constant block)
      o_ref   : (bt, tq, D)  output tile (written on the last kv step)
    Scratch:
      q_sc    : (bt, tq, D)  cached projection q' = x @ W   (compute_dtype)
      m_sc    : (bt, tq, 1)  running max          (f32)
      l_sc    : (bt, tq, 1)  running exp-sum      (f32)
      acc_sc  : (bt, tq, D)  running weighted ctx (f32)
    """

    def kernel(x_ref, ctx_ref, w_ref, o_ref, q_sc, m_sc, l_sc, acc_sc):
        kv = pl.program_id(2)
        bt, tq, d = x_ref.shape
        tk = ctx_ref.shape[1]

        @pl.when(kv == 0)
        def _init():
            # Fused projection q' = x @ W, computed once per (batch, query) tile and
            # cached in scratch.  The (bt, tq) -> (bt*tq) flatten is layout-free
            # because the wrapper only packs batches (bt > 1) when S is sublane-aligned.
            x2 = x_ref[...].reshape(bt * tq, d).astype(compute_dtype)
            q = jnp.dot(x2, w_ref[...], preferred_element_type=jnp.float32)
            q_sc[...] = q.reshape(bt, tq, d).astype(compute_dtype)
            m_sc[...] = jnp.full_like(m_sc, -jnp.inf)
            l_sc[...] = jnp.zeros_like(l_sc)
            acc_sc[...] = jnp.zeros_like(acc_sc)

        ctx = ctx_ref[...].astype(compute_dtype)
        if needs_kv_mask:
            # Zero padded / stale context rows so the PV matmul never touches garbage.
            row = lax.broadcasted_iota(jnp.int32, (1, tk, 1), 1)
            row_ok = (kv * tk + row) < kv_len
            ctx = jnp.where(row_ok, ctx, jnp.zeros_like(ctx))

        # sim = q' @ ctx^T : last-dim contraction, no explicit transpose.
        sim = jnp.einsum('bqd,bkd->bqk', q_sc[...], ctx,
                         preferred_element_type=jnp.float32)      # (bt, tq, tk) f32
        if needs_kv_mask:
            col = lax.broadcasted_iota(jnp.int32, (1, 1, tk), 2)
            sim = jnp.where((kv * tk + col) < kv_len, sim, -jnp.inf)

        # Online (flash) softmax update, all in f32.
        m_prev = m_sc[...]
        m_new = jnp.maximum(m_prev, jnp.max(sim, axis=-1, keepdims=True))
        alpha = jnp.exp(m_prev - m_new)
        p = jnp.exp(sim - m_new)
        l_sc[...] = alpha * l_sc[...] + jnp.sum(p, axis=-1, keepdims=True)
        acc_sc[...] = alpha * acc_sc[...] + jnp.einsum(
            'bqk,bkd->bqd', p.astype(compute_dtype), ctx,
            preferred_element_type=jnp.float32)
        m_sc[...] = m_new

        @pl.when(kv == pl.num_programs(2) - 1)
        def _finalize():
            # 1/denom folded into the (tq, D) epilogue; approx reciprocal -> EUP slot.
            inv = pl.reciprocal(l_sc[...], approx=True)
            o_ref[...] = (acc_sc[...] * inv).astype(o_ref.dtype)

    return kernel


def _pick_bt(b_total, cap):
    """Largest divisor of b_total that is <= cap (>= 1)."""
    cap = max(1, min(int(b_total), int(cap)))
    for cand in range(cap, 0, -1):
        if b_total % cand == 0:
            return cand
    return 1


def atten_qk_linear(x, wq, wk, context=None, *, prefer_bf16_matmul=True,
                    block_q=None, block_kv=None):
    """AttenQKlinear forward.

    x        : (B, S, D)
    wq, wk   : PyTorch-style nn.Linear weights, shape (out, in) = (D, D)
    context  : optional (B, S_ctx, D); defaults to x (self-attention)
    prefer_bf16_matmul : cast f32 MXU operands to bf16 (f32 accumulation).
                         Set False for near-bit-exact f32 results.
    block_q / block_kv : optional tile-size overrides (testing / tuning).
    """
    if context is None:
        context = x
    B, S, D = x.shape
    Bc, S_ctx, Dc = context.shape
    assert Bc == B and Dc == D, "context must match x in batch and feature dims"
    scale = float(D) ** (-0.5)

    if prefer_bf16_matmul and x.dtype == jnp.float32:
        compute_dtype = jnp.bfloat16
    else:
        compute_dtype = x.dtype

    # Fuse the two projections + the 1/sqrt(D) scale once (f32):
    #   sim = (x Wq^T)(ctx Wk^T)^T * s = x @ (Wq^T Wk * s) @ ctx^T
    # TODO(synk): for very large D the (D, D) fused weight should itself be K-tiled
    # instead of being held as a single VMEM-resident block.
    w_fused = (jnp.dot(wq.T.astype(jnp.float32), wk.astype(jnp.float32),
                       preferred_element_type=jnp.float32) * scale
               ).astype(compute_dtype)

    in_isz = jnp.dtype(x.dtype).itemsize
    c_isz = jnp.dtype(compute_dtype).itemsize

    # ---- Generation-aware VMEM budget ---------------------------------------
    try:
        vmem_cap = int(pltpu.get_tpu_info().vmem_capacity_bytes)
    except Exception:
        vmem_cap = 64 << 20  # conservative (v7x-class) fallback
    if vmem_cap <= (80 << 20):        # v7x: 64 MiB per TensorCore
        vmem_ceiling, max_tq = 44 << 20, 256
    else:                             # v5e / v6e: 128 MiB
        vmem_ceiling, max_tq = 88 << 20, 1024
    vmem_budget = vmem_ceiling - (6 << 20)   # headroom for compiler temporaries

    # ---- Tile selection ------------------------------------------------------
    # Context (KV) tile.
    if block_kv is not None:
        tk = min(int(block_kv), S_ctx)
    else:
        tk = S_ctx if S_ctx <= 512 else 512

    # Query tile + batch packing.  Pack batches only when S is sublane-aligned so
    # the in-kernel (bt, tq) -> (bt*tq) flatten never triggers a VMEM relayout.
    sublane = 8 if in_isz >= 4 else 16
    if block_q is not None:
        tq, bt = min(int(block_q), S), 1
    elif S <= max_tq:
        tq = S
        bt = _pick_bt(B, max(1, 512 // max(S, 1))) if S % sublane == 0 else 1
    else:
        tq, bt = max_tq, 1

    def vmem_estimate(bt_, tq_, tk_):
        dma = 2 * in_isz * bt_ * D * (2 * tq_ + tk_)     # x, out, ctx (double-buffered)
        dma += c_isz * D * D                             # fused weight (single-buffered)
        scratch = c_isz * bt_ * tq_ * D                  # q' cache
        scratch += 4 * bt_ * tq_ * (D + 2)               # acc + m + l (f32)
        work = 4 * bt_ * tq_ * (2 * tk_ + 2 * D)         # sim/p + f32 temporaries
        return dma + scratch + work

    # Feed the VMEM estimate back into tile choice: shrink bt, then tq, then tk.
    while vmem_estimate(bt, tq, tk) > vmem_budget:
        if bt > 1:
            bt = _pick_bt(B, bt // 2)
        elif tq > 128:
            tq = max(128, ((tq // 2) + 7) // 8 * 8)
        elif tk > 128:
            tk = max(128, ((tk // 2) + 7) // 8 * 8)
        else:
            break

    needs_kv_mask = (S_ctx % tk) != 0
    grid = (B // bt, pl.cdiv(S, tq), pl.cdiv(S_ctx, tk))

    # Megacore: always shard on batch; only open the query axis to core splitting
    # when the batch axis alone cannot feed two cores (keeps each core's context
    # blocks private -> no duplicated HBM traffic on v7x).
    q_sem = "arbitrary" if grid[0] >= 2 else "parallel"
    dim_sem = ("parallel", q_sem, "arbitrary")

    kernel = _make_kernel(compute_dtype, needs_kv_mask, S_ctx)

    # TODO(synk): for D < 128 the output lane dim is under-filled (masked stores and
    # idle MXU columns); packing several heads/feature groups along the last dim
    # would lift that floor.

    def _call(weight_pipeline_mode):
        if weight_pipeline_mode is None:
            w_spec = pl.BlockSpec((D, D), lambda b, i, k: (0, 0))
        else:
            w_spec = pl.BlockSpec((D, D), lambda b, i, k: (0, 0),
                                  pipeline_mode=weight_pipeline_mode)
        return pl.pallas_call(
            kernel,
            out_shape=jax.ShapeDtypeStruct((B, S, D), x.dtype),
            grid_spec=pltpu.PrefetchScalarGridSpec(
                num_scalar_prefetch=0,
                grid=grid,
                in_specs=[
                    pl.BlockSpec((bt, tq, D), lambda b, i, k: (b, i, 0)),   # x
                    pl.BlockSpec((bt, tk, D), lambda b, i, k: (b, k, 0)),   # context (=v)
                    w_spec,                                                 # fused weight
                ],
                out_specs=pl.BlockSpec((bt, tq, D), lambda b, i, k: (b, i, 0)),
                scratch_shapes=[
                    pltpu.VMEM((bt, tq, D), compute_dtype),   # q' cache
                    pltpu.VMEM((bt, tq, 1), jnp.float32),     # running max
                    pltpu.VMEM((bt, tq, 1), jnp.float32),     # running denom
                    pltpu.VMEM((bt, tq, D), jnp.float32),     # output accumulator
                ],
            ),
            compiler_params=pltpu.CompilerParams(
                dimension_semantics=dim_sem,
                vmem_limit_bytes=int(vmem_ceiling),
            ),
        )(x, context, w_fused)

    try:
        # Constant weight block never changes -> single-buffer it (saves D*D bytes).
        return _call(pl.Buffered(1))
    except Exception:
        # Fallback for builds where single-buffering via Buffered(1) is rejected.
        return _call(None)


def _reference(x, wq, wk, context=None):
    if context is None:
        context = x
    D = x.shape[-1]
    scale = float(D) ** (-0.5)
    q = jnp.einsum('bid,od->bio', x, wq)
    k = jnp.einsum('bjd,od->bjo', context, wk)
    sim = jnp.einsum('bid,bjd->bij', q, k) * scale
    attn = jax.nn.softmax(sim, axis=-1)
    return jnp.einsum('bij,bjd->bid', attn, context)


if __name__ == "__main__":
    B, S, D = 2, 8, 32  # batch, sequence length, query_dim

    key = jax.random.PRNGKey(0)
    kx, kq, kk, kc = jax.random.split(key, 4)
    x = jax.random.normal(kx, (B, S, D), dtype=jnp.float32)
    # Deterministic "parameters" matching nn.Linear(query_dim, query_dim, bias=False)
    wq = jax.random.normal(kq, (D, D), dtype=jnp.float32) * (D ** -0.5)
    wk = jax.random.normal(kk, (D, D), dtype=jnp.float32) * (D ** -0.5)

    # Case 1: self-attention, full-precision MXU path, single KV step.
    out = jax.block_until_ready(atten_qk_linear(x, wq, wk, prefer_bf16_matmul=False))
    ref = _reference(x, wq, wk)
    assert out.shape == (B, S, D)
    assert jnp.allclose(out, ref, atol=5e-3, rtol=5e-3), "mismatch (self, f32)"

    # Case 2: cross-attention with S_ctx=20 and a forced tiny KV tile (8) so the
    # flash-style online softmax runs 3 KV steps, including a masked partial tile.
    ctx = jax.random.normal(kc, (B, 20, D), dtype=jnp.float32)
    out2 = jax.block_until_ready(
        atten_qk_linear(x, wq, wk, ctx, prefer_bf16_matmul=False, block_kv=8))
    ref2 = _reference(x, wq, wk, ctx)
    assert out2.shape == (B, S, D)
    assert jnp.allclose(out2, ref2, atol=5e-3, rtol=5e-3), "mismatch (cross, tiled kv)"

    # Case 3: default bf16-MXU path (f32 accumulation) — reduced-precision tolerance.
    out3 = jax.block_until_ready(atten_qk_linear(x, wq, wk))
    assert out3.shape == (B, S, D)
    assert jnp.allclose(out3, ref, atol=5e-2, rtol=5e-2), "mismatch (self, bf16 mxu)"

    print("KERNEL_OK")
</pallas_src>

<mosaic_0001>
module attributes {stable_mosaic.version = 11 : i64} {
  func.func @kernel(%arg0: i32, %arg1: i32, %arg2: i32, %arg3: memref<2x8x32xf32, #tpu.memory_space<vmem>>, %arg4: memref<2x8x32xf32, #tpu.memory_space<vmem>>, %arg5: memref<32x32xf32, #tpu.memory_space<vmem>>, %arg6: memref<2x8x32xf32, #tpu.memory_space<vmem>>, %arg7: memref<2x8x32xf32, #tpu.memory_space<vmem>>, %arg8: memref<2x8x1xf32, #tpu.memory_space<vmem>>, %arg9: memref<2x8x1xf32, #tpu.memory_space<vmem>>, %arg10: memref<2x8x32xf32, #tpu.memory_space<vmem>>) attributes {dimension_semantics = [#tpu.dimension_semantics<parallel>, #tpu.dimension_semantics<parallel>, #tpu.dimension_semantics<arbitrary>], iteration_bounds = array<i64: 1, 1, 1>, scalar_prefetch = 0 : i64, scratch_operands = 4 : i64, tpu.core_type = #tpu.core_type<tc>, window_params = [{transform_indices = @transform_0, window_bounds = array<i64: 2, 8, 32>}, {transform_indices = @transform_1, window_bounds = array<i64: 2, 8, 32>}, {pipeline_mode = #tpu.pipeline_mode<synchronous>, transform_indices = @transform_2, window_bounds = array<i64: 32, 32>}, {transform_indices = @transform_3, window_bounds = array<i64: 2, 8, 32>}]} {
    %c0_i32 = arith.constant 0 : i32
    %0 = arith.cmpi eq, %arg2, %c0_i32 : i32
    %1 = arith.extui %0 : i1 to i32
    %c0_i32_0 = arith.constant 0 : i32
    %2 = arith.cmpi ne, %1, %c0_i32_0 : i32
    scf.if %2 {
      %c0_29 = arith.constant 0 : index
      %c0_30 = arith.constant 0 : index
      %c0_31 = arith.constant 0 : index
      %31 = vector.load %arg3[%c0_29, %c0_30, %c0_31] : memref<2x8x32xf32, #tpu.memory_space<vmem>>, vector<2x8x32xf32>
      %32 = vector.shape_cast %31 : vector<2x8x32xf32> to vector<16x32xf32>
      %c0_32 = arith.constant 0 : index
      %c0_33 = arith.constant 0 : index
      %33 = vector.load %arg5[%c0_32, %c0_33] : memref<32x32xf32, #tpu.memory_space<vmem>>, vector<32x32xf32>
      %cst_34 = arith.constant dense<0.000000e+00> : vector<16x32xf32>
      %34 = tpu.matmul %32, %33, %cst_34 {dimension_numbers = #tpu.dot_dimension_numbers<[1], [0], [0], [1], [0, 0, 1, 1], [], []>} : vector<16x32xf32>, vector<32x32xf32>, vector<16x32xf32> -> vector<16x32xf32>
      %35 = vector.shape_cast %34 : vector<16x32xf32> to vector<2x8x32xf32>
      %c0_35 = arith.constant 0 : index
      %c0_36 = arith.constant 0 : index
      %c0_37 = arith.constant 0 : index
      %36 = vector.load %arg7[%c0_35, %c0_36, %c0_37] : memref<2x8x32xf32, #tpu.memory_space<vmem>>, vector<2x8x32xf32>
      tpu.vector_store %arg7[%c0_35, %c0_36, %c0_37], %35 {strides = array<i32>} : memref<2x8x32xf32, #tpu.memory_space<vmem>>, vector<2x8x32xf32>,
      %cst_38 = arith.constant 0xFF800000 : f32
      %37 = vector.broadcast %cst_38 : f32 to vector<2x8x1xf32>
      %c0_39 = arith.constant 0 : index
      %c0_40 = arith.constant 0 : index
      %c0_41 = arith.constant 0 : index
      %38 = vector.load %arg8[%c0_39, %c0_40, %c0_41] : memref<2x8x1xf32, #tpu.memory_space<vmem>>, vector<2x8x1xf32>
      tpu.vector_store %arg8[%c0_39, %c0_40, %c0_41], %37 {strides = array<i32>} : memref<2x8x1xf32, #tpu.memory_space<vmem>>, vector<2x8x1xf32>,
      %cst_42 = arith.constant 0.000000e+00 : f32
      %39 = vector.broadcast %cst_42 : f32 to vector<2x8x1xf32>
      %c0_43 = arith.constant 0 : index
      %c0_44 = arith.constant 0 : index
      %c0_45 = arith.constant 0 : index
      %40 = vector.load %arg9[%c0_43, %c0_44, %c0_45] : memref<2x8x1xf32, #tpu.memory_space<vmem>>, vector<2x8x1xf32>
      tpu.vector_store %arg9[%c0_43, %c0_44, %c0_45], %39 {strides = array<i32>} : memref<2x8x1xf32, #tpu.memory_space<vmem>>, vector<2x8x1xf32>,
      %cst_46 = arith.constant 0.000000e+00 : f32
      %41 = vector.broadcast %cst_46 : f32 to vector<2x8x32xf32>
      %c0_47 = arith.constant 0 : index
      %c0_48 = arith.constant 0 : index
      %c0_49 = arith.constant 0 : index
      %42 = vector.load %arg10[%c0_47, %c0_48, %c0_49] : memref<2x8x32xf32, #tpu.memory_space<vmem>>, vector<2x8x32xf32>
      tpu.vector_store %arg10[%c0_47, %c0_48, %c0_49], %41 {strides = array<i32>} : memref<2x8x32xf32, #tpu.memory_space<vmem>>, vector<2x8x32xf32>,
    } else {
    }
    %c0 = arith.constant 0 : index
    %c0_1 = arith.constant 0 : index
    %c0_2 = arith.constant 0 : index
    %3 = vector.load %arg4[%c0, %c0_1, %c0_2] : memref<2x8x32xf32, #tpu.memory_space<vmem>>, vector<2x8x32xf32>
    %c0_3 = arith.constant 0 : index
    %c0_4 = arith.constant 0 : index
    %c0_5 = arith.constant 0 : index
    %4 = vector.load %arg7[%c0_3, %c0_4, %c0_5] : memref<2x8x32xf32, #tpu.memory_space<vmem>>, vector<2x8x32xf32>
    "tpu.trace_start"() <{level = 10 : i32, message = "bqd,bkd->bqk"}> : () -> ()
    %cst = arith.constant dense<0.000000e+00> : vector<2x8x8xf32>
    %5 = tpu.matmul %4, %3, %cst {dimension_numbers = #tpu.dot_dimension_numbers<[2], [2], [1], [1], [0, 0, 0, 1, 1, 1], [0], [0]>} : vector<2x8x32xf32>, vector<2x8x32xf32>, vector<2x8x8xf32> -> vector<2x8x8xf32>
    "tpu.trace_stop"() : () -> ()
    %c0_6 = arith.constant 0 : index
    %c0_7 = arith.constant 0 : index
    %c0_8 = arith.constant 0 : index
    %6 = vector.load %arg8[%c0_6, %c0_7, %c0_8] : memref<2x8x1xf32, #tpu.memory_space<vmem>>, vector<2x8x1xf32>
    %cst_9 = arith.constant dense<0xFF800000> : vector<2x8xf32>
    %7 = vector.multi_reduction <maximumf>, %5, %cst_9 [2] : vector<2x8x8xf32> to vector<2x8xf32>
    %8 = vector.shape_cast %7 : vector<2x8xf32> to vector<2x8x1xf32>
    %9 = arith.maximumf %6, %8 : vector<2x8x1xf32>
    %10 = arith.subf %6, %9 : vector<2x8x1xf32>
    %11 = math.exp %10 : vector<2x8x1xf32>
    %12 = vector.broadcast %9 : vector<2x8x1xf32> to vector<2x8x8xf32>
    %13 = arith.subf %5, %12 : vector<2x8x8xf32>
    %14 = math.exp %13 : vector<2x8x8xf32>
    %c0_10 = arith.constant 0 : index
    %c0_11 = arith.constant 0 : index
    %c0_12 = arith.constant 0 : index
    %15 = vector.load %arg9[%c0_10, %c0_11, %c0_12] : memref<2x8x1xf32, #tpu.memory_space<vmem>>, vector<2x8x1xf32>
    %16 = arith.mulf %11, %15 : vector<2x8x1xf32>
    %cst_13 = arith.constant dense<0.000000e+00> : vector<2x8xf32>
    %17 = vector.multi_reduction <add>, %14, %cst_13 [2] : vector<2x8x8xf32> to vector<2x8xf32>
    %18 = vector.shape_cast %17 : vector<2x8xf32> to vector<2x8x1xf32>
    %19 = arith.addf %16, %18 : vector<2x8x1xf32>
    %c0_14 = arith.constant 0 : index
    %c0_15 = arith.constant 0 : index
    %c0_16 = arith.constant 0 : index
    %20 = vector.load %arg9[%c0_14, %c0_15, %c0_16] : memref<2x8x1xf32, #tpu.memory_space<vmem>>, vector<2x8x1xf32>
    tpu.vector_store %arg9[%c0_14, %c0_15, %c0_16], %19 {strides = array<i32>} : memref<2x8x1xf32, #tpu.memory_space<vmem>>, vector<2x8x1xf32>,
    %c0_17 = arith.constant 0 : index
    %c0_18 = arith.constant 0 : index
    %c0_19 = arith.constant 0 : index
    %21 = vector.load %arg10[%c0_17, %c0_18, %c0_19] : memref<2x8x32xf32, #tpu.memory_space<vmem>>, vector<2x8x32xf32>
    %22 = vector.broadcast %11 : vector<2x8x1xf32> to vector<2x8x32xf32>
    %23 = arith.mulf %22, %21 : vector<2x8x32xf32>
    "tpu.trace_start"() <{level = 10 : i32, message = "bqk,bkd->bqd"}> : () -> ()
    %cst_20 = arith.constant dense<0.000000e+00> : vector<2x8x32xf32>
    %24 = tpu.matmul %14, %3, %cst_20 {dimension_numbers = #tpu.dot_dimension_numbers<[2], [1], [1], [2], [0, 0, 0, 1, 1, 2], [0], [0]>} : vector<2x8x8xf32>, vector<2x8x32xf32>, vector<2x8x32xf32> -> vector<2x8x32xf32>
    "tpu.trace_stop"() : () -> ()
    %25 = arith.addf %23, %24 : vector<2x8x32xf32>
    %c0_21 = arith.constant 0 : index
    %c0_22 = arith.constant 0 : index
    %c0_23 = arith.constant 0 : index
    %26 = vector.load %arg10[%c0_21, %c0_22, %c0_23] : memref<2x8x32xf32, #tpu.memory_space<vmem>>, vector<2x8x32xf32>
    tpu.vector_store %arg10[%c0_21, %c0_22, %c0_23], %25 {strides = array<i32>} : memref<2x8x32xf32, #tpu.memory_space<vmem>>, vector<2x8x32xf32>,
    %c0_24 = arith.constant 0 : index
    %c0_25 = arith.constant 0 : index
    %c0_26 = arith.constant 0 : index
    %27 = vector.load %arg8[%c0_24, %c0_25, %c0_26] : memref<2x8x1xf32, #tpu.memory_space<vmem>>, vector<2x8x1xf32>
    tpu.vector_store %arg8[%c0_24, %c0_25, %c0_26], %9 {strides = array<i32>} : memref<2x8x1xf32, #tpu.memory_space<vmem>>, vector<2x8x1xf32>,
    %c0_i32_27 = arith.constant 0 : i32
    %28 = arith.cmpi eq, %arg2, %c0_i32_27 : i32
    %29 = arith.extui %28 : i1 to i32
    %c0_i32_28 = arith.constant 0 : i32
    %30 = arith.cmpi ne, %29, %c0_i32_28 : i32
    scf.if %30 {
      %c0_29 = arith.constant 0 : index
      %c0_30 = arith.constant 0 : index
      %c0_31 = arith.constant 0 : index
      %31 = vector.load %arg9[%c0_29, %c0_30, %c0_31] : memref<2x8x1xf32, #tpu.memory_space<vmem>>, vector<2x8x1xf32>
      %32 = tpu.reciprocal %31 {approx = true} : vector<2x8x1xf32> -> vector<2x8x1xf32>
      %c0_32 = arith.constant 0 : index
      %c0_33 = arith.constant 0 : index
      %c0_34 = arith.constant 0 : index
      %33 = vector.load %arg10[%c0_32, %c0_33, %c0_34] : memref<2x8x32xf32, #tpu.memory_space<vmem>>, vector<2x8x32xf32>
      %34 = vector.broadcast %32 : vector<2x8x1xf32> to vector<2x8x32xf32>
      %35 = arith.mulf %33, %34 : vector<2x8x32xf32>
      %c0_35 = arith.constant 0 : index
      %c0_36 = arith.constant 0 : index
      %c0_37 = arith.constant 0 : index
      %36 = vector.load %arg6[%c0_35, %c0_36, %c0_37] : memref<2x8x32xf32, #tpu.memory_space<vmem>>, vector<2x8x32xf32>
      tpu.vector_store %arg6[%c0_35, %c0_36, %c0_37], %35 {strides = array<i32>} : memref<2x8x32xf32, #tpu.memory_space<vmem>>, vector<2x8x32xf32>,
    } else {
    }
    return
  }
  func.func @transform_0(%arg0: i32, %arg1: i32, %arg2: i32) -> (i32, i32, i32) {
    %c0_i32 = arith.constant 0 : i32
    %c0_i32_0 = arith.constant 0 : i32
    return %arg0, %arg1, %c0_i32 : i32, i32, i32
  }
  func.func @transform_1(%arg0: i32, %arg1: i32, %arg2: i32) -> (i32, i32, i32) {
    %c0_i32 = arith.constant 0 : i32
    %c0_i32_0 = arith.constant 0 : i32
    return %arg0, %arg2, %c0_i32 : i32, i32, i32
  }
  func.func @transform_2(%arg0: i32, %arg1: i32, %arg2: i32) -> (i32, i32) {
    %c0_i32 = arith.constant 0 : i32
    %c0_i32_0 = arith.constant 0 : i32
    %c0_i32_1 = arith.constant 0 : i32
    return %c0_i32, %c0_i32_0 : i32, i32
  }
  func.func @transform_3(%arg0: i32, %arg1: i32, %arg2: i32) -> (i32, i32, i32) {
    %c0_i32 = arith.constant 0 : i32
    %c0_i32_0 = arith.constant 0 : i32
    return %arg0, %arg1, %c0_i32 : i32, i32, i32
  }
}

module attributes {stable_mosaic.version = 11 : i64} {
  func.func @kernel(%arg0: i32, %arg1: i32, %arg2: i32, %arg3: memref<2x8x32xf32, #tpu.memory_space<vmem>>, %arg4: memref<2x8x32xf32, #tpu.memory_space<vmem>>, %arg5: memref<32x32xf32, #tpu.memory_space<vmem>>, %arg6: memref<2x8x32xf32, #tpu.memory_space<vmem>>, %arg7: memref<2x8x32xf32, #tpu.memory_space<vmem>>, %arg8: memref<2x8x1xf32, #tpu.memory_space<vmem>>, %arg9: memref<2x8x1xf32, #tpu.memory_space<vmem>>, %arg10: memref<2x8x32xf32, #tpu.memory_space<vmem>>) attributes {dimension_semantics = [#tpu.dimension_semantics<parallel>, #tpu.dimension_semantics<parallel>, #tpu.dimension_semantics<arbitrary>], iteration_bounds = array<i64: 1, 1, 1>, scalar_prefetch = 0 : i64, scratch_operands = 4 : i64, tpu.core_type = #tpu.core_type<tc>, window_params = [{transform_indices = @transform_0, window_bounds = array<i64: 2, 8, 32>}, {transform_indices = @transform_1, window_bounds = array<i64: 2, 8, 32>}, {pipeline_mode = #tpu.pipeline_mode<synchronous>, transform_indices = @transform_2, window_bounds = array<i64: 32, 32>}, {transform_indices = @transform_3, window_bounds = array<i64: 2, 8, 32>}]} {
    %c0_i32 = arith.constant 0 : i32
    %0 = arith.cmpi eq, %arg2, %c0_i32 : i32
    %1 = arith.extui %0 : i1 to i32
    %c0_i32_0 = arith.constant 0 : i32
    %2 = arith.cmpi ne, %1, %c0_i32_0 : i32
    scf.if %2 {
      %c0_29 = arith.constant 0 : index
      %c0_30 = arith.constant 0 : index
      %c0_31 = arith.constant 0 : index
      %31 = vector.load %arg3[%c0_29, %c0_30, %c0_31] : memref<2x8x32xf32, #tpu.memory_space<vmem>>, vector<2x8x32xf32>
      %32 = vector.shape_cast %31 : vector<2x8x32xf32> to vector<16x32xf32>
      %c0_32 = arith.constant 0 : index
      %c0_33 = arith.constant 0 : index
      %33 = vector.load %arg5[%c0_32, %c0_33] : memref<32x32xf32, #tpu.memory_space<vmem>>, vector<32x32xf32>
      %cst_34 = arith.constant dense<0.000000e+00> : vector<16x32xf32>
      %34 = tpu.matmul %32, %33, %cst_34 {dimension_numbers = #tpu.dot_dimension_numbers<[1], [0], [0], [1], [0, 0, 1, 1], [], []>} : vector<16x32xf32>, vector<32x32xf32>, vector<16x32xf32> -> vector<16x32xf32>
      %35 = vector.shape_cast %34 : vector<16x32xf32> to vector<2x8x32xf32>
      %c0_35 = arith.constant 0 : index
      %c0_36 = arith.constant 0 : index
      %c0_37 = arith.constant 0 : index
      %36 = vector.load %arg7[%c0_35, %c0_36, %c0_37] : memref<2x8x32xf32, #tpu.memory_space<vmem>>, vector<2x8x32xf32>
      tpu.vector_store %arg7[%c0_35, %c0_36, %c0_37], %35 {strides = array<i32>} : memref<2x8x32xf32, #tpu.memory_space<vmem>>, vector<2x8x32xf32>,
      %cst_38 = arith.constant 0xFF800000 : f32
      %37 = vector.broadcast %cst_38 : f32 to vector<2x8x1xf32>
      %c0_39 = arith.constant 0 : index
      %c0_40 = arith.constant 0 : index
      %c0_41 = arith.constant 0 : index
      %38 = vector.load %arg8[%c0_39, %c0_40, %c0_41] : memref<2x8x1xf32, #tpu.memory_space<vmem>>, vector<2x8x1xf32>
      tpu.vector_store %arg8[%c0_39, %c0_40, %c0_41], %37 {strides = array<i32>} : memref<2x8x1xf32, #tpu.memory_space<vmem>>, vector<2x8x1xf32>,
      %cst_42 = arith.constant 0.000000e+00 : f32
      %39 = vector.broadcast %cst_42 : f32 to vector<2x8x1xf32>
      %c0_43 = arith.constant 0 : index
      %c0_44 = arith.constant 0 : index
      %c0_45 = arith.constant 0 : index
      %40 = vector.load %arg9[%c0_43, %c0_44, %c0_45] : memref<2x8x1xf32, #tpu.memory_space<vmem>>, vector<2x8x1xf32>
      tpu.vector_store %arg9[%c0_43, %c0_44, %c0_45], %39 {strides = array<i32>} : memref<2x8x1xf32, #tpu.memory_space<vmem>>, vector<2x8x1xf32>,
      %cst_46 = arith.constant 0.000000e+00 : f32
      %41 = vector.broadcast %cst_46 : f32 to vector<2x8x32xf32>
      %c0_47 = arith.constant 0 : index
      %c0_48 = arith.constant 0 : index
      %c0_49 = arith.constant 0 : index
      %42 = vector.load %arg10[%c0_47, %c0_48, %c0_49] : memref<2x8x32xf32, #tpu.memory_space<vmem>>, vector<2x8x32xf32>
      tpu.vector_store %arg10[%c0_47, %c0_48, %c0_49], %41 {strides = array<i32>} : memref<2x8x32xf32, #tpu.memory_space<vmem>>, vector<2x8x32xf32>,
    } else {
    }
    %c0 = arith.constant 0 : index
    %c0_1 = arith.constant 0 : index
    %c0_2 = arith.constant 0 : index
    %3 = vector.load %arg4[%c0, %c0_1, %c0_2] : memref<2x8x32xf32, #tpu.memory_space<vmem>>, vector<2x8x32xf32>
    %c0_3 = arith.constant 0 : index
    %c0_4 = arith.constant 0 : index
    %c0_5 = arith.constant 0 : index
    %4 = vector.load %arg7[%c0_3, %c0_4, %c0_5] : memref<2x8x32xf32, #tpu.memory_space<vmem>>, vector<2x8x32xf32>
    "tpu.trace_start"() <{level = 10 : i32, message = "bqd,bkd->bqk"}> : () -> ()
    %cst = arith.constant dense<0.000000e+00> : vector<2x8x8xf32>
    %5 = tpu.matmul %4, %3, %cst {dimension_numbers = #tpu.dot_dimension_numbers<[2], [2], [1], [1], [0, 0, 0, 1, 1, 1], [0], [0]>} : vector<2x8x32xf32>, vector<2x8x32xf32>, vector<2x8x8xf32> -> vector<2x8x8xf32>
    "tpu.trace_stop"() : () -> ()
    %c0_6 = arith.constant 0 : index
    %c0_7 = arith.constant 0 : index
    %c0_8 = arith.constant 0 : index
    %6 = vector.load %arg8[%c0_6, %c0_7, %c0_8] : memref<2x8x1xf32, #tpu.memory_space<vmem>>, vector<2x8x1xf32>
    %cst_9 = arith.constant dense<0xFF800000> : vector<2x8xf32>
    %7 = vector.multi_reduction <maximumf>, %5, %cst_9 [2] : vector<2x8x8xf32> to vector<2x8xf32>
    %8 = vector.shape_cast %7 : vector<2x8xf32> to vector<2x8x1xf32>
    %9 = arith.maximumf %6, %8 : vector<2x8x1xf32>
    %10 = arith.subf %6, %9 : vector<2x8x1xf32>
    %11 = math.exp %10 : vector<2x8x1xf32>
    %12 = vector.broadcast %9 : vector<2x8x1xf32> to vector<2x8x8xf32>
    %13 = arith.subf %5, %12 : vector<2x8x8xf32>
    %14 = math.exp %13 : vector<2x8x8xf32>
    %c0_10 = arith.constant 0 : index
    %c0_11 = arith.constant 0 : index
    %c0_12 = arith.constant 0 : index
    %15 = vector.load %arg9[%c0_10, %c0_11, %c0_12] : memref<2x8x1xf32, #tpu.memory_space<vmem>>, vector<2x8x1xf32>
    %16 = arith.mulf %11, %15 : vector<2x8x1xf32>
    %cst_13 = arith.constant dense<0.000000e+00> : vector<2x8xf32>
    %17 = vector.multi_reduction <add>, %14, %cst_13 [2] : vector<2x8x8xf32> to vector<2x8xf32>
    %18 = vector.shape_cast %17 : vector<2x8xf32> to vector<2x8x1xf32>
    %19 = arith.addf %16, %18 : vector<2x8x1xf32>
    %c0_14 = arith.constant 0 : index
    %c0_15 = arith.constant 0 : index
    %c0_16 = arith.constant 0 : index
    %20 = vector.load %arg9[%c0_14, %c0_15, %c0_16] : memref<2x8x1xf32, #tpu.memory_space<vmem>>, vector<2x8x1xf32>
    tpu.vector_store %arg9[%c0_14, %c0_15, %c0_16], %19 {strides = array<i32>} : memref<2x8x1xf32, #tpu.memory_space<vmem>>, vector<2x8x1xf32>,
    %c0_17 = arith.constant 0 : index
    %c0_18 = arith.constant 0 : index
    %c0_19 = arith.constant 0 : index
    %21 = vector.load %arg10[%c0_17, %c0_18, %c0_19] : memref<2x8x32xf32, #tpu.memory_space<vmem>>, vector<2x8x32xf32>
    %22 = vector.broadcast %11 : vector<2x8x1xf32> to vector<2x8x32xf32>
    %23 = arith.mulf %22, %21 : vector<2x8x32xf32>
    "tpu.trace_start"() <{level = 10 : i32, message = "bqk,bkd->bqd"}> : () -> ()
    %cst_20 = arith.constant dense<0.000000e+00> : vector<2x8x32xf32>
    %24 = tpu.matmul %14, %3, %cst_20 {dimension_numbers = #tpu.dot_dimension_numbers<[2], [1], [1], [2], [0, 0, 0, 1, 1, 2], [0], [0]>} : vector<2x8x8xf32>, vector<2x8x32xf32>, vector<2x8x32xf32> -> vector<2x8x32xf32>
    "tpu.trace_stop"() : () -> ()
    %25 = arith.addf %23, %24 : vector<2x8x32xf32>
    %c0_21 = arith.constant 0 : index
    %c0_22 = arith.constant 0 : index
    %c0_23 = arith.constant 0 : index
    %26 = vector.load %arg10[%c0_21, %c0_22, %c0_23] : memref<2x8x32xf32, #tpu.memory_space<vmem>>, vector<2x8x32xf32>
    tpu.vector_store %arg10[%c0_21, %c0_22, %c0_23], %25 {strides = array<i32>} : memref<2x8x32xf32, #tpu.memory_space<vmem>>, vector<2x8x32xf32>,
    %c0_24 = arith.constant 0 : index
    %c0_25 = arith.constant 0 : index
    %c0_26 = arith.constant 0 : index
    %27 = vector.load %arg8[%c0_24, %c0_25, %c0_26] : memref<2x8x1xf32, #tpu.memory_space<vmem>>, vector<2x8x1xf32>
    tpu.vector_store %arg8[%c0_24, %c0_25, %c0_26], %9 {strides = array<i32>} : memref<2x8x1xf32, #tpu.memory_space<vmem>>, vector<2x8x1xf32>,
    %c0_i32_27 = arith.constant 0 : i32
    %28 = arith.cmpi eq, %arg2, %c0_i32_27 : i32
    %29 = arith.extui %28 : i1 to i32
    %c0_i32_28 = arith.constant 0 : i32
    %30 = arith.cmpi ne, %29, %c0_i32_28 : i32
    scf.if %30 {
      %c0_29 = arith.constant 0 : index
      %c0_30 = arith.constant 0 : index
      %c0_31 = arith.constant 0 : index
      %31 = vector.load %arg9[%c0_29, %c0_30, %c0_31] : memref<2x8x1xf32, #tpu.memory_space<vmem>>, vector<2x8x1xf32>
      %32 = tpu.reciprocal %31 {approx = true} : vector<2x8x1xf32> -> vector<2x8x1xf32>
      %c0_32 = arith.constant 0 : index
      %c0_33 = arith.constant 0 : index
      %c0_34 = arith.constant 0 : index
      %33 = vector.load %arg10[%c0_32, %c0_33, %c0_34] : memref<2x8x32xf32, #tpu.memory_space<vmem>>, vector<2x8x32xf32>
      %34 = vector.broadcast %32 : vector<2x8x1xf32> to vector<2x8x32xf32>
      %35 = arith.mulf %33, %34 : vector<2x8x32xf32>
      %c0_35 = arith.constant 0 : index
      %c0_36 = arith.constant 0 : index
      %c0_37 = arith.constant 0 : index
      %36 = vector.load %arg6[%c0_35, %c0_36, %c0_37] : memref<2x8x32xf32, #tpu.memory_space<vmem>>, vector<2x8x32xf32>
      tpu.vector_store %arg6[%c0_35, %c0_36, %c0_37], %35 {strides = array<i32>} : memref<2x8x32xf32, #tpu.memory_space<vmem>>, vector<2x8x32xf32>,
    } else {
    }
    return
  }
  func.func @transform_0(%arg0: i32, %arg1: i32, %arg2: i32) -> (i32, i32, i32) {
    %c0_i32 = arith.constant 0 : i32
    %c0_i32_0 = arith.constant 0 : i32
    return %arg0, %arg1, %c0_i32 : i32, i32, i32
  }
  func.func @transform_1(%arg0: i32, %arg1: i32, %arg2: i32) -> (i32, i32, i32) {
    %c0_i32 = arith.constant 0 : i32
    %c0_i32_0 = arith.constant 0 : i32
    return %arg0, %arg2, %c0_i32 : i32, i32, i32
  }
  func.func @transform_2(%arg0: i32, %arg1: i32, %arg2: i32) -> (i32, i32) {
    %c0_i32 = arith.constant 0 : i32
    %c0_i32_0 = arith.constant 0 : i32
    %c0_i32_1 = arith.constant 0 : i32
    return %c0_i32, %c0_i32_0 : i32, i32
  }
  func.func @transform_3(%arg0: i32, %arg1: i32, %arg2: i32) -> (i32, i32, i32) {
    %c0_i32 = arith.constant 0 : i32
    %c0_i32_0 = arith.constant 0 : i32
    return %arg0, %arg1, %c0_i32 : i32, i32, i32
  }
}

</mosaic_0001>

<llo_original>
// kernel: tpu_custom_call.1
$region0: #{tpu_custom_call.1}
  #allocation0 [shape = 'u32[]', space=smem, size = 0x4, offset = 0x4, fixed_abs, tag = 'smem constant byte address 0x4 - core index']
  #allocation1 [shape = 'u32[72,128]{1,0:T(1,128)}', space=vmem, size = 0x9000, scoped, tag = 'internal scratch']
  #allocation2 [shape = 'f32[2,8,32]{2,1,0:T(8,128)}', space=vmem, size = 0x2000, scoped, tag = 'scratch operand']
  #allocation3 [shape = 'f32[2,8,1]{2,1,0:T(8,128)}', space=vmem, size = 0x2000, scoped, tag = 'scratch operand']
  #allocation4 [shape = 'f32[2,8,1]{2,1,0:T(8,128)}', space=vmem, size = 0x2000, scoped, tag = 'scratch operand']
  #allocation5 [shape = 'f32[2,8,32]{2,1,0:T(8,128)}', space=vmem, size = 0x2000, scoped, tag = 'scratch operand']
  %s0 = inlined_call_operand.hbm [shape: f32[2,8,32], index: 0, kind: input, shape index: {}]
  %s1 = inlined_call_operand.hbm [shape: f32[2,8,32], index: 1, kind: input, shape index: {}]
  %s2 = inlined_call_operand.hbm [shape: f32[32,32], index: 2, kind: input, shape index: {}]
  %s3 = inlined_call_operand.hbm [shape: f32[2,8,32], index: 3, kind: output, shape index: {}]
  %s4 = sld [smem:[#allocation0]]
  $region42: #{tpu_custom_call.1} parent=0
    _
  %s6 = ssub.s32 1, %s4
  %s7 = scalar_select 0, %s6, %s4
  $region1: #{tpu_custom_call.1} parent=0
    #allocation6 [shape = 'u8[8192]{0}', space=vmem, size = 0x2000, scoped, tag = 'input window, operand 0, single buffered']
    #allocation7 [shape = 's32[1]{0}', space=sflag, size = 0x4, scoped, tag = 'scoped memory for tpu_custom_call.1']
    #allocation8 [shape = 's32[1]{0}', space=sflag, size = 0x4, scoped, tag = 'scoped memory for tpu_custom_call.1']
    #allocation9 [shape = 'u8[8192]{0}', space=vmem, size = 0x2000, scoped, tag = 'input window, operand 1, single buffered']
    #allocation10 [shape = 's32[1]{0}', space=sflag, size = 0x4, scoped, tag = 'scoped memory for tpu_custom_call.1']
    #allocation11 [shape = 'u8[16384]{0}', space=vmem, size = 0x4000, scoped, tag = 'input window, operand 2, single buffered']
    #allocation12 [shape = 'u8[8192]{0}', space=vmem, size = 0x2000, scoped, tag = 'output window, operand 0, single buffered']
    %8 = vsyncpa [#allocation7], 0
    %9 = vsyncpa [#allocation10], 0
    %10 = vsyncpa [#allocation8], 0
    // Predicated region
    $region2: #{tpu_custom_call.1} parent=1 // pred_check
      _
    $region3: #{tpu_custom_call.1} parent=1 // pred_check_branch
      %12 = sbr.rel (0) target = $region5
    $region4: #{tpu_custom_call.1} parent=1 // pred_region
      %14 = vsyncadd [#allocation7], 0
      %s15 = sshll.u32 %s0, 4
      %s16 = int_to_ptr.hbm [resolvable:$true] %s15
      %s17 = sshll.u32 [#allocation6], 4
      %s18 = int_to_ptr.vmem [resolvable:$true] %s17
      %23 = dma.hbm_to_vmem [thread:$0]  %s16, 256, %s18, [#allocation7], 128, 128, 8
    $region5: #{tpu_custom_call.1} parent=1 // pred_fallthru
      _
    // Predicated region
    $region6: #{tpu_custom_call.1} parent=1 // pred_check
      _
    $region7: #{tpu_custom_call.1} parent=1 // pred_check_branch
      %25 = sbr.rel (0) target = $region9
    $region8: #{tpu_custom_call.1} parent=1 // pred_region
      %27 = vsyncadd [#allocation10], 0
      %s28 = sshll.u32 %s1, 4
      %s29 = int_to_ptr.hbm [resolvable:$true] %s28
      %s30 = sshll.u32 [#allocation9], 4
      %s31 = int_to_ptr.vmem [resolvable:$true] %s30
      %36 = dma.hbm_to_vmem [thread:$0]  %s29, 256, %s31, [#allocation10], 128, 128, 8
    $region9: #{tpu_custom_call.1} parent=1 // pred_fallthru
      _
    // Predicated region
    $region10: #{tpu_custom_call.1} parent=1 // pred_check
      _
    $region11: #{tpu_custom_call.1} parent=1 // pred_check_branch
      %38 = sbr.rel (0) target = $region13
    $region12: #{tpu_custom_call.1} parent=1 // pred_region
      %40 = vsyncadd [#allocation10], 0
      %s41 = sshll.u32 %s2, 4
      %s42 = int_to_ptr.hbm [resolvable:$true] %s41
      %s43 = sshll.u32 [#allocation11], 4
      %s44 = int_to_ptr.vmem [resolvable:$true] %s43
      %49 = dma.hbm_to_vmem [thread:$0]  %s42, 512, %s44, [#allocation10], 128, 128, 8
    $region13: #{tpu_custom_call.1} parent=1 // pred_fallthru
      _
    // Predicated region
    $region14: #{tpu_custom_call.1} parent=1 // pred_check
      _
    $region15: #{tpu_custom_call.1} parent=1 // pred_check_branch
      %51 = sbr.rel (0) target = $region17
    $region16: #{tpu_custom_call.1} parent=1 // pred_region
      %53 = dma.done [#allocation7], 256
    $region17: #{tpu_custom_call.1} parent=1 // pred_fallthru
      _
    // Predicated region
    $region18: #{tpu_custom_call.1} parent=1 // pred_check
      _
    $region19: #{tpu_custom_call.1} parent=1 // pred_check_branch
      %55 = sbr.rel (0) target = $region21
    $region20: #{tpu_custom_call.1} parent=1 // pred_region
      %57 = dma.done [#allocation10], 256
    $region21: #{tpu_custom_call.1} parent=1 // pred_fallthru
      _
    // Predicated region
    $region22: #{tpu_custom_call.1} parent=1 // pred_check
      _
    $region23: #{tpu_custom_call.1} parent=1 // pred_check_branch
      %59 = sbr.rel (0) target = $region25
    $region24: #{tpu_custom_call.1} parent=1 // pred_region
      %61 = dma.done [#allocation10], 512
    $region25: #{tpu_custom_call.1} parent=1 // pred_fallthru
      _
    %p62 = scmp.eq.s32.totalorder 0, 0
    // Predicated region
    $region26: #{tpu_custom_call.1} parent=1 // pred_check
      %p63 = pneg %p62
    $region27: #{tpu_custom_call.1} parent=1 // pred_check_branch
      %65 = sbr.rel (%p63) target = $region29
    $region28: #{tpu_custom_call.1} parent=1 // pred_region
      %v66 = vld [vmem:[#allocation6] sm:$0xff]
      %v67 = vld [vmem:[#allocation6 + $0x8] sm:$0xff]
      %v68 = vld [vmem:[#allocation11] sm:$0xff]
      %v69 = vld [vmem:[#allocation11 + $0x8] sm:$0xff]
      %v70 = vld [vmem:[#allocation11 + $0x10] sm:$0xff]
      %v71 = vld [vmem:[#allocation11 + $0x18] sm:$0xff]
      %vm72 = vcmask 261120
      %v74 = vsel %vm72, %v66, 0
      %v77 = vsel %vm72, %v67, 0
      %79 = vmatpush.msra.mxu0 0.0
      %80 = vmatpush.msra.mxu0 0.0
      %81 = vmatpush.msra.mxu0 0.0
      %82 = vmatpush.msra.mxu0 0.0
      %83 = vmatpush.msra.mxu0 0.0
      %84 = vmatpush.msra.mxu0 0.0
      %85 = vmatpush.msra.mxu0 0.0
      %86 = vmatpush.msra.mxu0 0.0
      %87 = vmatpush.msra.mxu0 0.0
      %88 = vmatpush.msra.mxu0 0.0
      %89 = vmatpush.msra.mxu0 0.0
      %90 = vmatpush.msra.mxu0 0.0
      %91 = vmatpush.msra.mxu0 %v71
      %92 = vmatpush.msra.mxu0 %v70
      %93 = vmatpush.msra.mxu0 %v69
      %94 = vmatpush.msra.mxu0 %v68
      %95 = vmatmul.f32.gmra.mxu0 %v74
      %v96 = vpop.f32.mrf.mxu0
      %v97 = vadd.f32 0.0, %v96
      %98 = vmatmul.f32.gmra.mxu0 %v77
      %v99 = vpop.f32.mrf.mxu0
      %v100 = vadd.f32 0.0, %v99
      %101 = vdwg.mxu0
      %102 = vst.msk [vmem:[#allocation2] sm:$0xff] %vm72, %v97
      %103 = vst.msk [vmem:[#allocation2 + $0x8] sm:$0xff] %vm72, %v100
      %vm104 = vcmask 7168
      %105 = vst.msk [vmem:[#allocation3] sm:$0xff] %vm104, -inf
      %106 = vst.msk [vmem:[#allocation3 + $0x8] sm:$0xff] %vm104, -inf
      %107 = vst.msk [vmem:[#allocation4] sm:$0xff] %vm104, 0.0
      %108 = vst.msk [vmem:[#allocation4 + $0x8] sm:$0xff] %vm104, 0.0
      %109 = vst.msk [vmem:[#allocation5] sm:$0xff] %vm72, 0.0
      %110 = vst.msk [vmem:[#allocation5 + $0x8] sm:$0xff] %vm72, 0.0
    $region29: #{tpu_custom_call.1} parent=1 // pred_fallthru
      _
    %v111 = vld [vmem:[#allocation9] sm:$0xff]
    %v112 = vld [vmem:[#allocation9 + $0x8] sm:$0xff]
    %v113 = vld [vmem:[#allocation2] sm:$0xff]
    %v114 = vld [vmem:[#allocation2 + $0x8] sm:$0xff]
    %vm115 = vcmask 261120
    %v117 = vsel %vm115, %v113, 0
    %v120 = vsel %vm115, %v111, 0
    %122 = vmatpush.xpose.msra.mxu0 0.0
    %123 = vmatpush.xpose.msra.mxu0 0.0
    %124 = vmatpush.xpose.msra.mxu0 0.0
    %125 = vmatpush.xpose.msra.mxu0 0.0
    %126 = vmatpush.xpose.msra.mxu0 0.0
    %127 = vmatpush.xpose.msra.mxu0 0.0
    %128 = vmatpush.xpose.msra.mxu0 0.0
    %129 = vmatpush.xpose.msra.mxu0 0.0
    %130 = vmatpush.xpose.msra.mxu0 0.0
    %131 = vmatpush.xpose.msra.mxu0 0.0
    %132 = vmatpush.xpose.msra.mxu0 0.0
    %133 = vmatpush.xpose.msra.mxu0 0.0
    %134 = vmatpush.xpose.msra.mxu0 0.0
    %135 = vmatpush.xpose.msra.mxu0 0.0
    %136 = vmatpush.xpose.msra.mxu0 0.0
    %137 = vmatpush.xpose.msra.mxu0 %v120
    %138 = vmatmul.f32.gmra.mxu0 %v117
    %v139 = vpop.f32.mrf.mxu0
    %v140 = vadd.f32 0.0, %v139
    %141 = vdwg.mxu0
    %v143 = vsel %vm115, %v114, 0
    %v146 = vsel %vm115, %v112, 0
    %148 = vmatpush.xpose.msra.mxu0 0.0
    %149 = vmatpush.xpose.msra.mxu0 0.0
    %150 = vmatpush.xpose.msra.mxu0 0.0
    %151 = vmatpush.xpose.msra.mxu0 0.0
    %152 = vmatpush.xpose.msra.mxu0 0.0
    %153 = vmatpush.xpose.msra.mxu0 0.0
    %154 = vmatpush.xpose.msra.mxu0 0.0
    %155 = vmatpush.xpose.msra.mxu0 0.0
    %156 = vmatpush.xpose.msra.mxu0 0.0
    %157 = vmatpush.xpose.msra.mxu0 0.0
    %158 = vmatpush.xpose.msra.mxu0 0.0
    %159 = vmatpush.xpose.msra.mxu0 0.0
    %160 = vmatpush.xpose.msra.mxu0 0.0
    %161 = vmatpush.xpose.msra.mxu0 0.0
    %162 = vmatpush.xpose.msra.mxu0 0.0
    %163 = vmatpush.xpose.msra.mxu0 %v146
    %164 = vmatmul.f32.gmra.mxu0 %v143
    %v165 = vpop.f32.mrf.mxu0
    %v166 = vadd.f32 0.0, %v165
    %167 = vdwg.mxu0
    %v168 = vld [vmem:[#allocation3] sm:$0xff]
    %v169 = vld [vmem:[#allocation3 + $0x8] sm:$0xff]
    %vm170 = vcmask 64512
    %v171 = vsel %vm170, %v140, -inf
    %172 = vmax.xlane.f32.xlu0 %v171
    %v173 = vpop.xlane.xlu0 %172
    %v174 = vsel %vm170, %v166, -inf
    %175 = vmax.xlane.f32.xlu0 %v174
    %v176 = vpop.xlane.xlu0 %175
    %v177 = vmax.f32 %v168, %v173
    %v178 = vmax.f32 %v169, %v176
    %v179 = vsub.f32 %v168, %v177
    %v180 = vsub.f32 %v169, %v178
    %v181 = vmul.f32 %v179, 1.442695
    %v182 = vpow.pop %v181
    %v183 = vmul.f32 %v180, 1.442695
    %v184 = vpow.pop %v183
    %186 = vset.pattern.permute.xlu0 0
    %187 = vperm.xlu0 %186, %v177
    %v188 = vpop.permute.xlu0 %187
    %191 = vset.pattern.permute.xlu0 0
    %192 = vperm.xlu0 %191, %v178
    %v193 = vpop.permute.xlu0 %192
    %v195 = vsub.f32 %v140, %v188
    %v196 = vsub.f32 %v166, %v193
    %v197 = vmul.f32 %v195, 1.442695
    %v198 = vpow.pop %v197
    %v199 = vmul.f32 %v196, 1.442695
    %v200 = vpow.pop %v199
    %v201 = vld [vmem:[#allocation4] sm:$0xff]
    %v202 = vld [vmem:[#allocation4 + $0x8] sm:$0xff]
    %v203 = vmul.f32 %v182, %v201
    %v204 = vmul.f32 %v184, %v202
    %v205 = vsel %vm170, %v198, 0.0
    %206 = vadd.xlane.f32.xlu0 %v205
    %v207 = vpop.xlane.xlu0 %206
    %v208 = vsel %vm170, %v200, 0.0
    %209 = vadd.xlane.f32.xlu0 %v208
    %v210 = vpop.xlane.xlu0 %209
    %v211 = vadd.f32 %v203, %v207
    %v212 = vadd.f32 %v204, %v210
    %vm213 = vcmask 7168
    %214 = vst.msk [vmem:[#allocation4] sm:$0xff] %vm213, %v211
    %215 = vst.msk [vmem:[#allocation4 + $0x8] sm:$0xff] %vm213, %v212
    %v216 = vld [vmem:[#allocation5] sm:$0xff]
    %v217 = vld [vmem:[#allocation5 + $0x8] sm:$0xff]
    %219 = vset.pattern.permute.xlu0 0
    %220 = vperm.xlu0 %219, %v182
    %v221 = vpop.permute.xlu0 %220
    %224 = vset.pattern.permute.xlu0 0
    %225 = vperm.xlu0 %224, %v184
    %v226 = vpop.permute.xlu0 %225
    %v228 = vmul.f32 %v221, %v216
    %v229 = vmul.f32 %v226, %v217
    %v231 = vsel %vm170, %v198, 0
    %233 = vmatpush.msra.mxu0 0.0
    %234 = vmatpush.msra.mxu0 0.0
    %235 = vmatpush.msra.mxu0 0.0
    %236 = vmatpush.msra.mxu0 0.0
    %237 = vmatpush.msra.mxu0 0.0
    %238 = vmatpush.msra.mxu0 0.0
    %239 = vmatpush.msra.mxu0 0.0
    %240 = vmatpush.msra.mxu0 0.0
    %241 = vmatpush.msra.mxu0 0.0
    %242 = vmatpush.msra.mxu0 0.0
    %243 = vmatpush.msra.mxu0 0.0
    %244 = vmatpush.msra.mxu0 0.0
    %245 = vmatpush.msra.mxu0 0.0
    %246 = vmatpush.msra.mxu0 0.0
    %247 = vmatpush.msra.mxu0 0.0
    %248 = vmatpush.msra.mxu0 %v111
    %249 = vmatmul.f32.gmra.mxu0 %v231
    %v250 = vpop.f32.mrf.mxu0
    %v251 = vadd.f32 0.0, %v250
    %252 = vdwg.mxu0
    %v254 = vsel %vm170, %v200, 0
    %256 = vmatpush.msra.mxu0 0.0
    %257 = vmatpush.msra.mxu0 0.0
    %258 = vmatpush.msra.mxu0 0.0
    %259 = vmatpush.msra.mxu0 0.0
    %260 = vmatpush.msra.mxu0 0.0
    %261 = vmatpush.msra.mxu0 0.0
    %262 = vmatpush.msra.mxu0 0.0
    %263 = vmatpush.msra.mxu0 0.0
    %264 = vmatpush.msra.mxu0 0.0
    %265 = vmatpush.msra.mxu0 0.0
    %266 = vmatpush.msra.mxu0 0.0
    %267 = vmatpush.msra.mxu0 0.0
    %268 = vmatpush.msra.mxu0 0.0
    %269 = vmatpush.msra.mxu0 0.0
    %270 = vmatpush.msra.mxu0 0.0
    %271 = vmatpush.msra.mxu0 %v112
    %272 = vmatmul.f32.gmra.mxu0 %v254
    %v273 = vpop.f32.mrf.mxu0
    %v274 = vadd.f32 0.0, %v273
    %275 = vdwg.mxu0
    %v276 = vadd.f32 %v228, %v251
    %v277 = vadd.f32 %v229, %v274
    %278 = vst.msk [vmem:[#allocation5] sm:$0xff] %vm115, %v276
    %279 = vst.msk [vmem:[#allocation5 + $0x8] sm:$0xff] %vm115, %v277
    %280 = vst.msk [vmem:[#allocation3] sm:$0xff] %vm213, %v177
    %281 = vst.msk [vmem:[#allocation3 + $0x8] sm:$0xff] %vm213, %v178
    // Predicated region
    $region30: #{tpu_custom_call.1} parent=1 // pred_check
      %p282 = pneg %p62
    $region31: #{tpu_custom_call.1} parent=1 // pred_check_branch
      %284 = sbr.rel (%p282) target = $region33
    $region32: #{tpu_custom_call.1} parent=1 // pred_region
      %v285 = vld [vmem:[#allocation4] sm:$0xff]
      %v286 = vld [vmem:[#allocation4 + $0x8] sm:$0xff]
      %v287 = vrcp.pop %v285
      %v288 = vrcp.pop %v286
      %v289 = vld [vmem:[#allocation5] sm:$0xff]
      %v290 = vld [vmem:[#allocation5 + $0x8] sm:$0xff]
      %292 = vset.pattern.permute.xlu0 0
      %293 = vperm.xlu0 %292, %v287
      %v294 = vpop.permute.xlu0 %293
      %297 = vset.pattern.permute.xlu0 0
      %298 = vperm.xlu0 %297, %v288
      %v299 = vpop.permute.xlu0 %298
      %v301 = vmul.f32 %v289, %v294
      %v302 = vmul.f32 %v290, %v299
      %303 = vst.msk [vmem:[#allocation12] sm:$0xff] %vm115, %v301
      %304 = vst.msk [vmem:[#allocation12 + $0x8] sm:$0xff] %vm115, %v302
    $region33: #{tpu_custom_call.1} parent=1 // pred_fallthru
      _
    // Predicated region
    $region34: #{tpu_custom_call.1} parent=1 // pred_check
      _
    $region35: #{tpu_custom_call.1} parent=1 // pred_check_branch
      %306 = sbr.rel (0) target = $region37
    $region36: #{tpu_custom_call.1} parent=1 // pred_region
      %308 = vsyncadd [#allocation8], 0
      %s309 = sshll.u32 [#allocation12], 4
      %s310 = int_to_ptr.vmem [resolvable:$true] %s309
      %s311 = sshll.u32 %s3, 4
      %s312 = int_to_ptr.hbm [resolvable:$true] %s311
      %317 = dma.vmem_to_hbm [thread:$0]  %s310, 256, %s312, [#allocation8], 128, 128, 8
    $region37: #{tpu_custom_call.1} parent=1 // pred_fallthru
      _
    // Predicated region
    $region38: #{tpu_custom_call.1} parent=1 // pred_check
      _
    $region39: #{tpu_custom_call.1} parent=1 // pred_check_branch
      %319 = sbr.rel (0) target = $region41
    $region40: #{tpu_custom_call.1} parent=1 // pred_region
      %321 = dma.done [#allocation8], 256
    $region41: #{tpu_custom_call.1} parent=1 // pred_fallthru
      _
    %322 = vsyncpa [#allocation7], 1
    %323 = vsyncpa [#allocation10], 1
    %324 = vsyncpa [#allocation8], 1

// kernel: tpu_custom_call.1
$region0: #{tpu_custom_call.1}
  #allocation0 [shape = 'u32[]', space=smem, size = 0x4, offset = 0x4, fixed_abs, tag = 'smem constant byte address 0x4 - core index']
  #allocation1 [shape = 'u32[72,128]{1,0:T(1,128)}', space=vmem, size = 0x9000, scoped, tag = 'internal scratch']
  #allocation2 [shape = 'f32[2,8,32]{2,1,0:T(8,128)}', space=vmem, size = 0x2000, scoped, tag = 'scratch operand']
  #allocation3 [shape = 'f32[2,8,1]{2,1,0:T(8,128)}', space=vmem, size = 0x2000, scoped, tag = 'scratch operand']
  #allocation4 [shape = 'f32[2,8,1]{2,1,0:T(8,128)}', space=vmem, size = 0x2000, scoped, tag = 'scratch operand']
  #allocation5 [shape = 'f32[2,8,32]{2,1,0:T(8,128)}', space=vmem, size = 0x2000, scoped, tag = 'scratch operand']
  %s0 = inlined_call_operand.hbm [shape: f32[2,8,32], index: 0, kind: input, shape index: {}]
  %s1 = inlined_call_operand.hbm [shape: f32[2,8,32], index: 1, kind: input, shape index: {}]
  %s2 = inlined_call_operand.hbm [shape: f32[32,32], index: 2, kind: input, shape index: {}]
  %s3 = inlined_call_operand.hbm [shape: f32[2,8,32], index: 3, kind: output, shape index: {}]
  %s4 = sld [smem:[#allocation0]]
  $region42: #{tpu_custom_call.1} parent=0
    _
  %s6 = ssub.s32 1, %s4
  %s7 = scalar_select 0, %s6, %s4
  $region1: #{tpu_custom_call.1} parent=0
    #allocation6 [shape = 'u8[8192]{0}', space=vmem, size = 0x2000, scoped, tag = 'input window, operand 0, single buffered']
    #allocation7 [shape = 's32[1]{0}', space=sflag, size = 0x4, scoped, tag = 'scoped memory for tpu_custom_call.1']
    #allocation8 [shape = 's32[1]{0}', space=sflag, size = 0x4, scoped, tag = 'scoped memory for tpu_custom_call.1']
    #allocation9 [shape = 'u8[8192]{0}', space=vmem, size = 0x2000, scoped, tag = 'input window, operand 1, single buffered']
    #allocation10 [shape = 's32[1]{0}', space=sflag, size = 0x4, scoped, tag = 'scoped memory for tpu_custom_call.1']
    #allocation11 [shape = 'u8[16384]{0}', space=vmem, size = 0x4000, scoped, tag = 'input window, operand 2, single buffered']
    #allocation12 [shape = 'u8[8192]{0}', space=vmem, size = 0x2000, scoped, tag = 'output window, operand 0, single buffered']
    %8 = vsyncpa [#allocation7], 0
    %9 = vsyncpa [#allocation10], 0
    %10 = vsyncpa [#allocation8], 0
    // Predicated region
    $region2: #{tpu_custom_call.1} parent=1 // pred_check
      _
    $region3: #{tpu_custom_call.1} parent=1 // pred_check_branch
      %12 = sbr.rel (0) target = $region5
    $region4: #{tpu_custom_call.1} parent=1 // pred_region
      %14 = vsyncadd [#allocation7], 0
      %s15 = sshll.u32 %s0, 4
      %s16 = int_to_ptr.hbm [resolvable:$true] %s15
      %s17 = sshll.u32 [#allocation6], 4
      %s18 = int_to_ptr.vmem [resolvable:$true] %s17
      %23 = dma.hbm_to_vmem [thread:$0]  %s16, 256, %s18, [#allocation7], 128, 128, 8
    $region5: #{tpu_custom_call.1} parent=1 // pred_fallthru
      _
    // Predicated region
    $region6: #{tpu_custom_call.1} parent=1 // pred_check
      _
    $region7: #{tpu_custom_call.1} parent=1 // pred_check_branch
      %25 = sbr.rel (0) target = $region9
    $region8: #{tpu_custom_call.1} parent=1 // pred_region
      %27 = vsyncadd [#allocation10], 0
      %s28 = sshll.u32 %s1, 4
      %s29 = int_to_ptr.hbm [resolvable:$true] %s28
      %s30 = sshll.u32 [#allocation9], 4
      %s31 = int_to_ptr.vmem [resolvable:$true] %s30
      %36 = dma.hbm_to_vmem [thread:$0]  %s29, 256, %s31, [#allocation10], 128, 128, 8
    $region9: #{tpu_custom_call.1} parent=1 // pred_fallthru
      _
    // Predicated region
    $region10: #{tpu_custom_call.1} parent=1 // pred_check
      _
    $region11: #{tpu_custom_call.1} parent=1 // pred_check_branch
      %38 = sbr.rel (0) target = $region13
    $region12: #{tpu_custom_call.1} parent=1 // pred_region
      %40 = vsyncadd [#allocation10], 0
      %s41 = sshll.u32 %s2, 4
      %s42 = int_to_ptr.hbm [resolvable:$true] %s41
      %s43 = sshll.u32 [#allocation11], 4
      %s44 = int_to_ptr.vmem [resolvable:$true] %s43
      %49 = dma.hbm_to_vmem [thread:$0]  %s42, 512, %s44, [#allocation10], 128, 128, 8
    $region13: #{tpu_custom_call.1} parent=1 // pred_fallthru
      _
    // Predicated region
    $region14: #{tpu_custom_call.1} parent=1 // pred_check
      _
    $region15: #{tpu_custom_call.1} parent=1 // pred_check_branch
      %51 = sbr.rel (0) target = $region17
    $region16: #{tpu_custom_call.1} parent=1 // pred_region
      %53 = dma.done [#allocation7], 256
    $region17: #{tpu_custom_call.1} parent=1 // pred_fallthru
      _
    // Predicated region
    $region18: #{tpu_custom_call.1} parent=1 // pred_check
      _
    $region19: #{tpu_custom_call.1} parent=1 // pred_check_branch
      %55 = sbr.rel (0) target = $region21
    $region20: #{tpu_custom_call.1} parent=1 // pred_region
      %57 = dma.done [#allocation10], 256
    $region21: #{tpu_custom_call.1} parent=1 // pred_fallthru
      _
    // Predicated region
    $region22: #{tpu_custom_call.1} parent=1 // pred_check
      _
    $region23: #{tpu_custom_call.1} parent=1 // pred_check_branch
      %59 = sbr.rel (0) target = $region25
    $region24: #{tpu_custom_call.1} parent=1 // pred_region
      %61 = dma.done [#allocation10], 512
    $region25: #{tpu_custom_call.1} parent=1 // pred_fallthru
      _
    %p62 = scmp.eq.s32.totalorder 0, 0
    // Predicated region
    $region26: #{tpu_custom_call.1} parent=1 // pred_check
      %p63 = pneg %p62
    $region27: #{tpu_custom_call.1} parent=1 // pred_check_branch
      %65 = sbr.rel (%p63) target = $region29
    $region28: #{tpu_custom_call.1} parent=1 // pred_region
      %v66 = vld [vmem:[#allocation6] sm:$0xff]
      %v67 = vld [vmem:[#allocation6 + $0x8] sm:$0xff]
      %v68 = vld [vmem:[#allocation11] sm:$0xff]
      %v69 = vld [vmem:[#allocation11 + $0x8] sm:$0xff]
      %v70 = vld [vmem:[#allocation11 + $0x10] sm:$0xff]
      %v71 = vld [vmem:[#allocation11 + $0x18] sm:$0xff]
      %vm72 = vcmask 261120
      %v74 = vsel %vm72, %v66, 0
      %v77 = vsel %vm72, %v67, 0
      %79 = vmatpush.msra.mxu0 0.0
      %80 = vmatpush.msra.mxu0 0.0
      %81 = vmatpush.msra.mxu0 0.0
      %82 = vmatpush.msra.mxu0 0.0
      %83 = vmatpush.msra.mxu0 0.0
      %84 = vmatpush.msra.mxu0 0.0
      %85 = vmatpush.msra.mxu0 0.0
      %86 = vmatpush.msra.mxu0 0.0
      %87 = vmatpush.msra.mxu0 0.0
      %88 = vmatpush.msra.mxu0 0.0
      %89 = vmatpush.msra.mxu0 0.0
      %90 = vmatpush.msra.mxu0 0.0
      %91 = vmatpush.msra.mxu0 %v71
      %92 = vmatpush.msra.mxu0 %v70
      %93 = vmatpush.msra.mxu0 %v69
      %94 = vmatpush.msra.mxu0 %v68
      %95 = vmatmul.f32.gmra.mxu0 %v74
      %v96 = vpop.f32.mrf.mxu0
      %v97 = vadd.f32 0.0, %v96
      %98 = vmatmul.f32.gmra.mxu0 %v77
      %v99 = vpop.f32.mrf.mxu0
      %v100 = vadd.f32 0.0, %v99
      %101 = vdwg.mxu0
      %102 = vst.msk [vmem:[#allocation2] sm:$0xff] %vm72, %v97
      %103 = vst.msk [vmem:[#allocation2 + $0x8] sm:$0xff] %vm72, %v100
      %vm104 = vcmask 7168
      %105 = vst.msk [vmem:[#allocation3] sm:$0xff] %vm104, -inf
      %106 = vst.msk [vmem:[#allocation3 + $0x8] sm:$0xff] %vm104, -inf
      %107 = vst.msk [vmem:[#allocation4] sm:$0xff] %vm104, 0.0
      %108 = vst.msk [vmem:[#allocation4 + $0x8] sm:$0xff] %vm104, 0.0
      %109 = vst.msk [vmem:[#allocation5] sm:$0xff] %vm72, 0.0
      %110 = vst.msk [vmem:[#allocation5 + $0x8] sm:$0xff] %vm72, 0.0
    $region29: #{tpu_custom_call.1} parent=1 // pred_fallthru
      _
    %v111 = vld [vmem:[#allocation9] sm:$0xff]
    %v112 = vld [vmem:[#allocation9 + $0x8] sm:$0xff]
    %v113 = vld [vmem:[#allocation2] sm:$0xff]
    %v114 = vld [vmem:[#allocation2 + $0x8] sm:$0xff]
    %vm115 = vcmask 261120
    %v117 = vsel %vm115, %v113, 0
    %v120 = vsel %vm115, %v111, 0
    %122 = vmatpush.xpose.msra.mxu0 0.0
    %123 = vmatpush.xpose.msra.mxu0 0.0
    %124 = vmatpush.xpose.msra.mxu0 0.0
    %125 = vmatpush.xpose.msra.mxu0 0.0
    %126 = vmatpush.xpose.msra.mxu0 0.0
    %127 = vmatpush.xpose.msra.mxu0 0.0
    %128 = vmatpush.xpose.msra.mxu0 0.0
    %129 = vmatpush.xpose.msra.mxu0 0.0
    %130 = vmatpush.xpose.msra.mxu0 0.0
    %131 = vmatpush.xpose.msra.mxu0 0.0
    %132 = vmatpush.xpose.msra.mxu0 0.0
    %133 = vmatpush.xpose.msra.mxu0 0.0
    %134 = vmatpush.xpose.msra.mxu0 0.0
    %135 = vmatpush.xpose.msra.mxu0 0.0
    %136 = vmatpush.xpose.msra.mxu0 0.0
    %137 = vmatpush.xpose.msra.mxu0 %v120
    %138 = vmatmul.f32.gmra.mxu0 %v117
    %v139 = vpop.f32.mrf.mxu0
    %v140 = vadd.f32 0.0, %v139
    %141 = vdwg.mxu0
    %v143 = vsel %vm115, %v114, 0
    %v146 = vsel %vm115, %v112, 0
    %148 = vmatpush.xpose.msra.mxu0 0.0
    %149 = vmatpush.xpose.msra.mxu0 0.0
    %150 = vmatpush.xpose.msra.mxu0 0.0
    %151 = vmatpush.xpose.msra.mxu0 0.0
    %152 = vmatpush.xpose.msra.mxu0 0.0
    %153 = vmatpush.xpose.msra.mxu0 0.0
    %154 = vmatpush.xpose.msra.mxu0 0.0
    %155 = vmatpush.xpose.msra.mxu0 0.0
    %156 = vmatpush.xpose.msra.mxu0 0.0
    %157 = vmatpush.xpose.msra.mxu0 0.0
    %158 = vmatpush.xpose.msra.mxu0 0.0
    %159 = vmatpush.xpose.msra.mxu0 0.0
    %160 = vmatpush.xpose.msra.mxu0 0.0
    %161 = vmatpush.xpose.msra.mxu0 0.0
    %162 = vmatpush.xpose.msra.mxu0 0.0
    %163 = vmatpush.xpose.msra.mxu0 %v146
    %164 = vmatmul.f32.gmra.mxu0 %v143
    %v165 = vpop.f32.mrf.mxu0
    %v166 = vadd.f32 0.0, %v165
    %167 = vdwg.mxu0
    %v168 = vld [vmem:[#allocation3] sm:$0xff]
    %v169 = vld [vmem:[#allocation3 + $0x8] sm:$0xff]
    %vm170 = vcmask 64512
    %v171 = vsel %vm170, %v140, -inf
    %172 = vmax.xlane.f32.xlu0 %v171
    %v173 = vpop.xlane.xlu0 %172
    %v174 = vsel %vm170, %v166, -inf
    %175 = vmax.xlane.f32.xlu0 %v174
    %v176 = vpop.xlane.xlu0 %175
    %v177 = vmax.f32 %v168, %v173
    %v178 = vmax.f32 %v169, %v176
    %v179 = vsub.f32 %v168, %v177
    %v180 = vsub.f32 %v169, %v178
    %v181 = vmul.f32 %v179, 1.442695
    %v182 = vpow.pop %v181
    %v183 = vmul.f32 %v180, 1.442695
    %v184 = vpow.pop %v183
    %186 = vset.pattern.permute.xlu0 0
    %187 = vperm.xlu0 %186, %v177
    %v188 = vpop.permute.xlu0 %187
    %191 = vset.pattern.permute.xlu0 0
    %192 = vperm.xlu0 %191, %v178
    %v193 = vpop.permute.xlu0 %192
    %v195 = vsub.f32 %v140, %v188
    %v196 = vsub.f32 %v166, %v193
    %v197 = vmul.f32 %v195, 1.442695
    %v198 = vpow.pop %v197
    %v199 = vmul.f32 %v196, 1.442695
    %v200 = vpow.pop %v199
    %v201 = vld [vmem:[#allocation4] sm:$0xff]
    %v202 = vld [vmem:[#allocation4 + $0x8] sm:$0xff]
    %v203 = vmul.f32 %v182, %v201
    %v204 = vmul.f32 %v184, %v202
    %v205 = vsel %vm170, %v198, 0.0
    %206 = vadd.xlane.f32.xlu0 %v205
    %v207 = vpop.xlane.xlu0 %206
    %v208 = vsel %vm170, %v200, 0.0
    %209 = vadd.xlane.f32.xlu0 %v208
    %v210 = vpop.xlane.xlu0 %209
    %v211 = vadd.f32 %v203, %v207
    %v212 = vadd.f32 %v204, %v210
    %vm213 = vcmask 7168
    %214 = vst.msk [vmem:[#allocation4] sm:$0xff] %vm213, %v211
    %215 = vst.msk [vmem:[#allocation4 + $0x8] sm:$0xff] %vm213, %v212
    %v216 = vld [vmem:[#allocation5] sm:$0xff]
    %v217 = vld [vmem:[#allocation5 + $0x8] sm:$0xff]
    %219 = vset.pattern.permute.xlu0 0
    %220 = vperm.xlu0 %219, %v182
    %v221 = vpop.permute.xlu0 %220
    %224 = vset.pattern.permute.xlu0 0
    %225 = vperm.xlu0 %224, %v184
    %v226 = vpop.permute.xlu0 %225
    %v228 = vmul.f32 %v221, %v216
    %v229 = vmul.f32 %v226, %v217
    %v231 = vsel %vm170, %v198, 0
    %233 = vmatpush.msra.mxu0 0.0
    %234 = vmatpush.msra.mxu0 0.0
    %235 = vmatpush.msra.mxu0 0.0
    %236 = vmatpush.msra.mxu0 0.0
    %237 = vmatpush.msra.mxu0 0.0
    %238 = vmatpush.msra.mxu0 0.0
    %239 = vmatpush.msra.mxu0 0.0
    %240 = vmatpush.msra.mxu0 0.0
    %241 = vmatpush.msra.mxu0 0.0
    %242 = vmatpush.msra.mxu0 0.0
    %243 = vmatpush.msra.mxu0 0.0
    %244 = vmatpush.msra.mxu0 0.0
    %245 = vmatpush.msra.mxu0 0.0
    %246 = vmatpush.msra.mxu0 0.0
    %247 = vmatpush.msra.mxu0 0.0
    %248 = vmatpush.msra.mxu0 %v111
    %249 = vmatmul.f32.gmra.mxu0 %v231
    %v250 = vpop.f32.mrf.mxu0
    %v251 = vadd.f32 0.0, %v250
    %252 = vdwg.mxu0
    %v254 = vsel %vm170, %v200, 0
    %256 = vmatpush.msra.mxu0 0.0
    %257 = vmatpush.msra.mxu0 0.0
    %258 = vmatpush.msra.mxu0 0.0
    %259 = vmatpush.msra.mxu0 0.0
    %260 = vmatpush.msra.mxu0 0.0
    %261 = vmatpush.msra.mxu0 0.0
    %262 = vmatpush.msra.mxu0 0.0
    %263 = vmatpush.msra.mxu0 0.0
    %264 = vmatpush.msra.mxu0 0.0
    %265 = vmatpush.msra.mxu0 0.0
    %266 = vmatpush.msra.mxu0 0.0
    %267 = vmatpush.msra.mxu0 0.0
    %268 = vmatpush.msra.mxu0 0.0
    %269 = vmatpush.msra.mxu0 0.0
    %270 = vmatpush.msra.mxu0 0.0
    %271 = vmatpush.msra.mxu0 %v112
    %272 = vmatmul.f32.gmra.mxu0 %v254
    %v273 = vpop.f32.mrf.mxu0
    %v274 = vadd.f32 0.0, %v273
    %275 = vdwg.mxu0
    %v276 = vadd.f32 %v228, %v251
    %v277 = vadd.f32 %v229, %v274
    %278 = vst.msk [vmem:[#allocation5] sm:$0xff] %vm115, %v276
    %279 = vst.msk [vmem:[#allocation5 + $0x8] sm:$0xff] %vm115, %v277
    %280 = vst.msk [vmem:[#allocation3] sm:$0xff] %vm213, %v177
    %281 = vst.msk [vmem:[#allocation3 + $0x8] sm:$0xff] %vm213, %v178
    // Predicated region
    $region30: #{tpu_custom_call.1} parent=1 // pred_check
      %p282 = pneg %p62
    $region31: #{tpu_custom_call.1} parent=1 // pred_check_branch
      %284 = sbr.rel (%p282) target = $region33
    $region32: #{tpu_custom_call.1} parent=1 // pred_region
      %v285 = vld [vmem:[#allocation4] sm:$0xff]
      %v286 = vld [vmem:[#allocation4 + $0x8] sm:$0xff]
      %v287 = vrcp.pop %v285
      %v288 = vrcp.pop %v286
      %v289 = vld [vmem:[#allocation5] sm:$0xff]
      %v290 = vld [vmem:[#allocation5 + $0x8] sm:$0xff]
      %292 = vset.pattern.permute.xlu0 0
      %293 = vperm.xlu0 %292, %v287
      %v294 = vpop.permute.xlu0 %293
      %297 = vset.pattern.permute.xlu0 0
      %298 = vperm.xlu0 %297, %v288
      %v299 = vpop.permute.xlu0 %298
      %v301 = vmul.f32 %v289, %v294
      %v302 = vmul.f32 %v290, %v299
      %303 = vst.msk [vmem:[#allocation12] sm:$0xff] %vm115, %v301
      %304 = vst.msk [vmem:[#allocation12 + $0x8] sm:$0xff] %vm115, %v302
    $region33: #{tpu_custom_call.1} parent=1 // pred_fallthru
      _
    // Predicated region
    $region34: #{tpu_custom_call.1} parent=1 // pred_check
      _
    $region35: #{tpu_custom_call.1} parent=1 // pred_check_branch
      %306 = sbr.rel (0) target = $region37
    $region36: #{tpu_custom_call.1} parent=1 // pred_region
      %308 = vsyncadd [#allocation8], 0
      %s309 = sshll.u32 [#allocation12], 4
      %s310 = int_to_ptr.vmem [resolvable:$true] %s309
      %s311 = sshll.u32 %s3, 4
      %s312 = int_to_ptr.hbm [resolvable:$true] %s311
      %317 = dma.vmem_to_hbm [thread:$0]  %s310, 256, %s312, [#allocation8], 128, 128, 8
    $region37: #{tpu_custom_call.1} parent=1 // pred_fallthru
      _
    // Predicated region
    $region38: #{tpu_custom_call.1} parent=1 // pred_check
      _
    $region39: #{tpu_custom_call.1} parent=1 // pred_check_branch
      %319 = sbr.rel (0) target = $region41
    $region40: #{tpu_custom_call.1} parent=1 // pred_region
      %321 = dma.done [#allocation8], 256
    $region41: #{tpu_custom_call.1} parent=1 // pred_fallthru
      _
    %322 = vsyncpa [#allocation7], 1
    %323 = vsyncpa [#allocation10], 1
    %324 = vsyncpa [#allocation8], 1

</llo_original>
